<compile_context>
chip_gen: v6e
topology: v6e:2x2x1
jax: 0.10.0
libtpu: 0.0.40
codegen_flags: <defaults>
</compile_context>

<pallas_src>
import functools
import math

import numpy as np
import jax
import jax.numpy as jnp
from jax.experimental import pallas as pl
from jax.experimental.pallas import tpu as pltpu


# ----------------------------------------------------------------------------
# Generation-aware tile sizing (v5e/v6e: 128 MiB VMEM -> bigger tiles;
# v7x: 64 MiB -> 512-row tiles keep double-buffered blocks inside budget).
# ----------------------------------------------------------------------------

def _pick_tile_m():
    try:
        info = pltpu.get_tpu_info()
        vmem = getattr(info, "vmem_capacity_bytes", 64 * 1024 * 1024)
    except Exception:  # pragma: no cover - conservative fallback
        vmem = 64 * 1024 * 1024
    return 1024 if vmem >= (128 * 1024 * 1024) else 512


DEFAULT_TILE_M = _pick_tile_m()
STAGE_TILE_HW = DEFAULT_TILE_M


# ----------------------------------------------------------------------------
# Generic fused linear kernel:  out = A @ W [+ A2 @ W2] [+ bias], optional ReLU
# Tiled over rows (M) with a parallel grid axis; weights stay whole in VMEM.
# ----------------------------------------------------------------------------

def _linear_kernel(*refs, has_a2, has_bias, relu):
    i = 0
    a = refs[i][...]; i += 1
    w = refs[i][...]; i += 1
    acc = jnp.dot(a, w, preferred_element_type=jnp.float32)
    if has_a2:
        a2 = refs[i][...]; i += 1
        w2 = refs[i][...]; i += 1
        acc = acc + jnp.dot(a2, w2, preferred_element_type=jnp.float32)
    if has_bias:
        acc = acc + refs[i][...]; i += 1
    if relu:
        acc = jnp.maximum(acc, 0.0)
    o_ref = refs[i]
    o_ref[...] = acc.astype(o_ref.dtype)


def pallas_linear(a, w, *, a2=None, w2=None, bias=None, relu=False,
                  tile_m=DEFAULT_TILE_M, compute_dtype=jnp.bfloat16):
    """A (M,K) @ W (K,N) [+ A2 @ W2] [+ bias], optional ReLU.  M-tiled."""
    M, K = a.shape
    N = w.shape[1]
    tm = M if M <= tile_m else tile_m
    Mp = ((M + tm - 1) // tm) * tm

    def _prep_rows(x):
        x = x.astype(compute_dtype)
        if Mp != M:
            x = jnp.pad(x, ((0, Mp - M), (0, 0)))
        return x

    inputs = [_prep_rows(a), w.astype(compute_dtype)]
    in_specs = [pl.BlockSpec((tm, K), lambda i: (i, 0)),
                pl.BlockSpec((K, N), lambda i: (0, 0))]
    has_a2 = a2 is not None
    if has_a2:
        K2 = a2.shape[1]
        inputs += [_prep_rows(a2), w2.astype(compute_dtype)]
        in_specs += [pl.BlockSpec((tm, K2), lambda i: (i, 0)),
                     pl.BlockSpec((K2, N), lambda i: (0, 0))]
    has_bias = bias is not None
    if has_bias:
        inputs.append(bias.reshape(1, N).astype(jnp.float32))
        in_specs.append(pl.BlockSpec((1, N), lambda i: (0, 0)))

    out = pl.pallas_call(
        functools.partial(_linear_kernel, has_a2=has_a2, has_bias=has_bias,
                          relu=relu),
        out_shape=jax.ShapeDtypeStruct((Mp, N), jnp.float32),
        grid=(Mp // tm,),
        in_specs=in_specs,
        out_specs=pl.BlockSpec((tm, N), lambda i: (i, 0)),
        compiler_params=pltpu.CompilerParams(
            dimension_semantics=("parallel",)),
    )(*inputs)
    return out[:M] if Mp != M else out


# ----------------------------------------------------------------------------
# Fused backbone stage kernel:
#   merge-matmul(+bias,ReLU) -> q / lk / lv projections -> masked language
#   cross-attention -> output proj -> residual add, all in one pallas_call.
# Grid: (batch, HW tiles); language projections are tiny and recomputed / tile.
# ----------------------------------------------------------------------------

def _stage_kernel(v_ref, l_ref, m_ref, mw_ref, mb_ref, qw_ref, lkw_ref,
                  lvw_ref, pw_ref, vo_ref, at_ref, *, scale):
    v_in = v_ref[0]                                    # (T, Cin)  bf16
    v = jnp.dot(v_in, mw_ref[...],
                preferred_element_type=jnp.float32) + mb_ref[...]
    v = jnp.maximum(v, 0.0)                            # (T, Cout) f32

    l = l_ref[0]                                       # (L, Ct)   bf16
    lk = jnp.dot(l, lkw_ref[...], preferred_element_type=jnp.float32)
    lv = jnp.dot(l, lvw_ref[...], preferred_element_type=jnp.float32)
    q = jnp.dot(v.astype(jnp.bfloat16), qw_ref[...],
                preferred_element_type=jnp.float32)    # (T, Cout)

    s = jax.lax.dot_general(q.astype(jnp.bfloat16), lk.astype(jnp.bfloat16),
                            (((1,), (1,)), ((), ())),
                            preferred_element_type=jnp.float32) * scale
    m = m_ref[0]                                       # (1, L)
    s = jnp.where(m > 0.5, s, -1e30)                   # mask language padding
    s = s - jnp.max(s, axis=-1, keepdims=True)
    e = jnp.exp(s)
    denom = jnp.maximum(jnp.sum(e, axis=-1, keepdims=True), 1e-30)
    p = e * pl.reciprocal(denom, approx=True)          # (T, L)  softmax
    at_ref[0] = p.astype(at_ref.dtype)

    fused = jnp.dot(p.astype(jnp.bfloat16), lv.astype(jnp.bfloat16),
                    preferred_element_type=jnp.float32)
    out = v + jnp.dot(fused.astype(jnp.bfloat16), pw_ref[...],
                      preferred_element_type=jnp.float32)   # residual fused
    vo_ref[0] = out.astype(vo_ref.dtype)


def _space_to_depth(x, f):
    B, H, W, C = x.shape
    x = x.reshape(B, H // f, f, W // f, f, C)
    x = jnp.transpose(x, (0, 1, 3, 2, 4, 5))
    return x.reshape(B, H // f, W // f, f * f * C)


def _stage(v_nhwc, sp, f, l_blct, mask_b1l):
    """One backbone stage: patch merge + masked language cross-attn fusion."""
    v = _space_to_depth(v_nhwc, f)
    B, Hs, Ws, Cin = v.shape
    HW = Hs * Ws
    L = l_blct.shape[1]
    c_out = sp["merge_w"].shape[1]
    scale = 1.0 / math.sqrt(c_out)

    tile = HW if HW <= STAGE_TILE_HW else STAGE_TILE_HW
    HWp = ((HW + tile - 1) // tile) * tile
    v_flat = v.reshape(B, HW, Cin)
    if HWp != HW:
        v_flat = jnp.pad(v_flat, ((0, 0), (0, HWp - HW), (0, 0)))

    v_out, attn = pl.pallas_call(
        functools.partial(_stage_kernel, scale=scale),
        out_shape=(jax.ShapeDtypeStruct((B, HWp, c_out), jnp.float32),
                   jax.ShapeDtypeStruct((B, HWp, L), jnp.float32)),
        grid=(B, HWp // tile),
        in_specs=[
            pl.BlockSpec((1, tile, Cin), lambda b, t: (b, t, 0)),
            pl.BlockSpec((1, L, l_blct.shape[2]), lambda b, t: (b, 0, 0)),
            pl.BlockSpec((1, 1, L), lambda b, t: (b, 0, 0)),
            pl.BlockSpec((Cin, c_out), lambda b, t: (0, 0)),
            pl.BlockSpec((1, c_out), lambda b, t: (0, 0)),
            pl.BlockSpec((c_out, c_out), lambda b, t: (0, 0)),
            pl.BlockSpec((l_blct.shape[2], c_out), lambda b, t: (0, 0)),
            pl.BlockSpec((l_blct.shape[2], c_out), lambda b, t: (0, 0)),
            pl.BlockSpec((c_out, c_out), lambda b, t: (0, 0)),
        ],
        out_specs=(pl.BlockSpec((1, tile, c_out), lambda b, t: (b, t, 0)),
                   pl.BlockSpec((1, tile, L), lambda b, t: (b, t, 0))),
        compiler_params=pltpu.CompilerParams(
            dimension_semantics=("parallel", "parallel")),
    )(v_flat.astype(jnp.bfloat16),
      l_blct.astype(jnp.bfloat16),
      mask_b1l.astype(jnp.float32),
      sp["merge_w"].astype(jnp.bfloat16),
      sp["merge_b"].reshape(1, c_out).astype(jnp.float32),
      sp["q_w"].astype(jnp.bfloat16),
      sp["lk_w"].astype(jnp.bfloat16),
      sp["lv_w"].astype(jnp.bfloat16),
      sp["proj_w"].astype(jnp.bfloat16))

    v_out = v_out[:, :HW].reshape(B, Hs, Ws, c_out)
    attn = attn[:, :HW]
    return v_out, attn


# ----------------------------------------------------------------------------
# Bilinear interpolation (align_corners=True) as ONE Pallas matmul per resize
# via a Kronecker interpolation matrix.
# TODO(synk): for large images the dense (OH*OW, H*W) Kronecker matrix does
# not scale; a separable / VPU-lerp fused kernel would be the production path.
# ----------------------------------------------------------------------------

def _interp_matrix(out_size, in_size):
    w = np.zeros((out_size, in_size), np.float32)
    if out_size == 1 or in_size == 1:
        w[:, 0] = 1.0
        return w
    src = np.arange(out_size, dtype=np.float64) * (in_size - 1) / (out_size - 1)
    lo = np.clip(np.floor(src).astype(np.int64), 0, in_size - 1)
    hi = np.minimum(lo + 1, in_size - 1)
    frac = (src - lo).astype(np.float32)
    w[np.arange(out_size), lo] += 1.0 - frac
    w[np.arange(out_size), hi] += frac
    return w


def _kron_interp(out_h, out_w, in_h, in_w):
    return jnp.asarray(np.kron(_interp_matrix(out_h, in_h),
                               _interp_matrix(out_w, in_w)))   # (OH*OW, H*W)


def bilinear_resize_nhwc(x, out_h, out_w):
    """F.interpolate(mode='bilinear', align_corners=True) on NHWC tensors."""
    B, H, W, C = x.shape
    if (out_h, out_w) == (H, W):
        return x
    w2 = _kron_interp(out_h, out_w, H, W)
    xf = jnp.transpose(x, (1, 2, 0, 3)).reshape(H * W, B * C)  # lane-dense N
    yf = pallas_linear(w2, xf, compute_dtype=jnp.float32)
    y = yf.reshape(out_h, out_w, B, C)
    return jnp.transpose(y, (2, 0, 1, 3))                      # (B, OH, OW, C)


def bilinear_resize_to_nchw(x, out_h, out_w):
    """Final resize: same math, but emits NCHW directly (fused transpose)."""
    B, H, W, C = x.shape
    w2 = _kron_interp(out_h, out_w, H, W)
    xf = jnp.transpose(x, (1, 2, 0, 3)).reshape(H * W, B * C)
    yf = pallas_linear(w2, xf, compute_dtype=jnp.float32)
    y = yf.reshape(out_h, out_w, B, C)
    return jnp.transpose(y, (2, 3, 0, 1))                      # (B, C, OH, OW)


# ----------------------------------------------------------------------------
# Model config & deterministic parameter init
# ----------------------------------------------------------------------------

VOCAB = 100
CT = 32                     # text hidden size
CHANS = (32, 64, 96, 128)   # visual channels per stage
FACTORS = (4, 2, 2, 2)      # spatial downsample factor per stage
CH_DEC = 64                 # classifier hidden channels
N_CLASS = 2


def init_params(key):
    def dense(k, fan_in, fan_out):
        return jax.random.normal(k, (fan_in, fan_out), jnp.float32) * 0.05

    keys = iter(jax.random.split(key, 64))
    p = {}
    # TODO(synk): the real module uses a pretrained BERT text encoder; here it
    # is a deterministic embedding + 2-layer MLP with the same (B, L, Ct) API.
    p["emb"] = jax.random.normal(next(keys), (VOCAB, CT), jnp.float32) * 0.05
    p["txt_w1"], p["txt_b1"] = dense(next(keys), CT, 2 * CT), jnp.zeros((2 * CT,))
    p["txt_w2"], p["txt_b2"] = dense(next(keys), 2 * CT, CT), jnp.zeros((CT,))

    # backbone stages (patch-merging + PWAM-style language fusion)
    stages = []
    c_prev = 3
    for c_out, f in zip(CHANS, FACTORS):
        s = {
            "merge_w": dense(next(keys), f * f * c_prev, c_out),
            "merge_b": jnp.zeros((c_out,)),
            "q_w": dense(next(keys), c_out, c_out),
            "lk_w": dense(next(keys), CT, c_out),
            "lv_w": dense(next(keys), CT, c_out),
            "proj_w": dense(next(keys), c_out, c_out),
        }
        stages.append(s)
        c_prev = c_out
    p["stages"] = stages

    # classifier (SimpleDecoding-like top-down fusion); concat weights are
    # stored pre-split so concat([h, feat]) @ W == h @ W_h + feat @ W_f.
    c1, c2, c3, c4 = CHANS
    p["dec_w4"], p["dec_b4"] = dense(next(keys), c4, CH_DEC), jnp.zeros((CH_DEC,))
    p["dec3_wh"], p["dec3_wf"] = dense(next(keys), CH_DEC, CH_DEC), dense(next(keys), c3, CH_DEC)
    p["dec_b3"] = jnp.zeros((CH_DEC,))
    p["dec2_wh"], p["dec2_wf"] = dense(next(keys), CH_DEC, CH_DEC), dense(next(keys), c2, CH_DEC)
    p["dec_b2"] = jnp.zeros((CH_DEC,))
    p["dec1_wh"], p["dec1_wf"] = dense(next(keys), CH_DEC, CH_DEC), dense(next(keys), c1, CH_DEC)
    p["dec_b1"] = jnp.zeros((CH_DEC,))
    p["dec_out_w"], p["dec_out_b"] = dense(next(keys), CH_DEC, N_CLASS), jnp.zeros((N_CLASS,))
    return p


# ----------------------------------------------------------------------------
# Sub-networks (glue orchestrating Pallas calls)
# ----------------------------------------------------------------------------

def text_encode(p, text):
    """text (B, L) int32 -> l_feats (B, L, Ct)."""
    emb = jnp.take(p["emb"], text, axis=0)          # gather (host-side glue)
    B, L, Ct = emb.shape
    h = pallas_linear(emb.reshape(B * L, Ct), p["txt_w1"], bias=p["txt_b1"],
                      relu=True)
    h = pallas_linear(h, p["txt_w2"], bias=p["txt_b2"])
    return h.reshape(B, L, Ct)


def backbone(p, x_nchw, l_feats_bctl, l_mask_bl1):
    v = jnp.transpose(x_nchw, (0, 2, 3, 1))                # NCHW -> NHWC
    l_blct = jnp.transpose(l_feats_bctl, (0, 2, 1))        # (B, L, Ct)
    mask_b1l = jnp.transpose(l_mask_bl1, (0, 2, 1))        # (B, 1, L)
    feats, attn = [], None
    for sp, f in zip(p["stages"], FACTORS):
        v, attn = _stage(v, sp, f, l_blct, mask_b1l)
        feats.append(v)
    return tuple(feats), attn                              # attn from last stage


def classifier(p, x_c4, x_c3, x_c2, x_c1):
    """Simple top-down decode head; NHWC features, output (B, H/4, W/4, N_CLASS)."""
    B, H4, W4, C4 = x_c4.shape
    h = pallas_linear(x_c4.reshape(B * H4 * W4, C4), p["dec_w4"],
                      bias=p["dec_b4"], relu=True).reshape(B, H4, W4, CH_DEC)

    for feat, w_h, w_f, b in ((x_c3, p["dec3_wh"], p["dec3_wf"], p["dec_b3"]),
                              (x_c2, p["dec2_wh"], p["dec2_wf"], p["dec_b2"]),
                              (x_c1, p["dec1_wh"], p["dec1_wf"], p["dec_b1"])):
        _, Hn, Wn, Cn = feat.shape
        h = bilinear_resize_nhwc(h, Hn, Wn)
        # concat-free fused decode: one kernel, two accumulating matmuls
        h = pallas_linear(h.reshape(B * Hn * Wn, CH_DEC), w_h,
                          a2=feat.reshape(B * Hn * Wn, Cn), w2=w_f,
                          bias=b, relu=True).reshape(B, Hn, Wn, CH_DEC)

    _, Hh, Ww, _ = h.shape
    logits = pallas_linear(h.reshape(B * Hh * Ww, CH_DEC),
                           p["dec_out_w"], bias=p["dec_out_b"])
    return logits.reshape(B, Hh, Ww, N_CLASS)


def lavt_forward(p, x, text, l_mask):
    """Mirrors _LAVTOneSimpleDecode.forward; returns (x_nchw, attn)."""
    input_shape = x.shape[-2:]
    l_feats = text_encode(p, text)                       # (B, L, Ct)
    l_feats = jnp.transpose(l_feats, (0, 2, 1))          # .permute(0, 2, 1)
    l_mask_u = l_mask[:, :, None]                        # .unsqueeze(-1)
    features, attn = backbone(p, x, l_feats, l_mask_u)
    x_c1, x_c2, x_c3, x_c4 = features
    logits = classifier(p, x_c4, x_c3, x_c2, x_c1)       # NHWC, stride-4 res.
    out = bilinear_resize_to_nchw(logits, input_shape[0], input_shape[1])
    return out, attn


# ----------------------------------------------------------------------------
# Entry point
# ----------------------------------------------------------------------------

if __name__ == "__main__":
    key = jax.random.PRNGKey(0)
    B, H, W, L = 2, 32, 32, 8
    kx, kt, kp = jax.random.split(key, 3)

    x = jax.random.normal(kx, (B, 3, H, W), jnp.float32)
    text = jax.random.randint(kt, (B, L), 0, VOCAB, dtype=jnp.int32)
    lengths = jnp.array([[L], [L - 3]], jnp.int32)
    l_mask = (jnp.arange(L)[None, :] < lengths).astype(jnp.float32)   # (B, L)

    params = init_params(kp)
    out, attn = lavt_forward(params, x, text, l_mask)
    jax.block_until_ready((out, attn))

    assert out.shape == (B, N_CLASS, H, W), out.shape
    assert attn.shape[0] == B and attn.shape[-1] == L, attn.shape
    print("KERNEL_OK")
</pallas_src>

<mosaic_0001>
module attributes {stable_mosaic.version = 11 : i64} {
  func.func @_linear_kernel(%arg0: i32, %arg1: memref<16x32xbf16, #tpu.memory_space<vmem>>, %arg2: memref<32x64xbf16, #tpu.memory_space<vmem>>, %arg3: memref<1x64xf32, #tpu.memory_space<vmem>>, %arg4: memref<16x64xf32, #tpu.memory_space<vmem>>) attributes {dimension_semantics = [#tpu.dimension_semantics<parallel>], iteration_bounds = array<i64: 1>, scalar_prefetch = 0 : i64, scratch_operands = 0 : i64, tpu.core_type = #tpu.core_type<tc>, window_params = [{transform_indices = @transform_0, window_bounds = array<i64: 16, 32>}, {pipeline_mode = #tpu.pipeline_mode<synchronous>, transform_indices = @transform_1, window_bounds = array<i64: 32, 64>}, {pipeline_mode = #tpu.pipeline_mode<synchronous>, transform_indices = @transform_2, window_bounds = array<i64: 1, 64>}, {transform_indices = @transform_3, window_bounds = array<i64: 16, 64>}]} {
    %c0 = arith.constant 0 : index
    %c0_0 = arith.constant 0 : index
    %0 = vector.load %arg1[%c0, %c0_0] : memref<16x32xbf16, #tpu.memory_space<vmem>>, vector<16x32xbf16>
    %c0_1 = arith.constant 0 : index
    %c0_2 = arith.constant 0 : index
    %1 = vector.load %arg2[%c0_1, %c0_2] : memref<32x64xbf16, #tpu.memory_space<vmem>>, vector<32x64xbf16>
    %cst = arith.constant dense<0.000000e+00> : vector<16x64xf32>
    %2 = tpu.matmul %0, %1, %cst {dimension_numbers = #tpu.dot_dimension_numbers<[1], [0], [0], [1], [0, 0, 1, 1], [], []>} : vector<16x32xbf16>, vector<32x64xbf16>, vector<16x64xf32> -> vector<16x64xf32>
    %c0_3 = arith.constant 0 : index
    %c0_4 = arith.constant 0 : index
    %3 = vector.load %arg3[%c0_3, %c0_4] : memref<1x64xf32, #tpu.memory_space<vmem>>, vector<1x64xf32>
    %4 = vector.broadcast %3 : vector<1x64xf32> to vector<16x64xf32>
    %5 = arith.addf %2, %4 : vector<16x64xf32>
    %cst_5 = arith.constant 0.000000e+00 : f32
    %6 = vector.broadcast %cst_5 : f32 to vector<16x64xf32>
    %7 = arith.maximumf %5, %6 : vector<16x64xf32>
    %c0_6 = arith.constant 0 : index
    %c0_7 = arith.constant 0 : index
    %8 = vector.load %arg4[%c0_6, %c0_7] : memref<16x64xf32, #tpu.memory_space<vmem>>, vector<16x64xf32>
    tpu.vector_store %arg4[%c0_6, %c0_7], %7 {strides = array<i32>} : memref<16x64xf32, #tpu.memory_space<vmem>>, vector<16x64xf32>,
    return
  }
  func.func @transform_0(%arg0: i32) -> (i32, i32) {
    %c0_i32 = arith.constant 0 : i32
    %c0_i32_0 = arith.constant 0 : i32
    return %arg0, %c0_i32 : i32, i32
  }
  func.func @transform_1(%arg0: i32) -> (i32, i32) {
    %c0_i32 = arith.constant 0 : i32
    %c0_i32_0 = arith.constant 0 : i32
    %c0_i32_1 = arith.constant 0 : i32
    return %c0_i32, %c0_i32_0 : i32, i32
  }
  func.func @transform_2(%arg0: i32) -> (i32, i32) {
    %c0_i32 = arith.constant 0 : i32
    %c0_i32_0 = arith.constant 0 : i32
    %c0_i32_1 = arith.constant 0 : i32
    return %c0_i32, %c0_i32_0 : i32, i32
  }
  func.func @transform_3(%arg0: i32) -> (i32, i32) {
    %c0_i32 = arith.constant 0 : i32
    %c0_i32_0 = arith.constant 0 : i32
    return %arg0, %c0_i32 : i32, i32
  }
}

</mosaic_0001>

<llo_original>
// kernel: tpu_custom_call.1
$region0: #{tpu_custom_call.1}
  #allocation0 [shape = 'u32[]', space=smem, size = 0x4, offset = 0x4, fixed_abs, tag = 'smem constant byte address 0x4 - core index']
  #allocation1 [shape = 'u32[144,128]{1,0:T(1,128)}', space=vmem, size = 0x12000, scoped, tag = 'internal scratch']
  %s0 = inlined_call_operand.hbm [shape: bf16[16,32], index: 0, kind: input, shape index: {}]
  %s1 = inlined_call_operand.hbm [shape: bf16[32,64], index: 1, kind: input, shape index: {}]
  %s2 = inlined_call_operand.vmem [shape: f32[1,64], index: 2, kind: input, shape index: {}]
  %s3 = inlined_call_operand.hbm [shape: f32[16,64], index: 3, kind: output, shape index: {}]
  %s4 = sld [smem:[#allocation0]]
  $region30: #{tpu_custom_call.1} parent=0
    _
  %s6 = ssub.s32 1, %s4
  %s7 = scalar_select 0, %s6, %s4
  $region1: #{tpu_custom_call.1} parent=0
    #allocation2 [shape = 'u8[4096]{0}', space=vmem, size = 0x1000, scoped, tag = 'input window, operand 0, single buffered']
    #allocation3 [shape = 's32[1]{0}', space=sflag, size = 0x4, scoped, tag = 'scoped memory for tpu_custom_call.1']
    #allocation4 [shape = 's32[1]{0}', space=sflag, size = 0x4, scoped, tag = 'scoped memory for tpu_custom_call.1']
    #allocation5 [shape = 'u8[8192]{0}', space=vmem, size = 0x2000, scoped, tag = 'input window, operand 1, single buffered']
    #allocation6 [shape = 's32[1]{0}', space=sflag, size = 0x4, scoped, tag = 'scoped memory for tpu_custom_call.1']
    #allocation7 [shape = 'u8[8192]{0}', space=vmem, size = 0x2000, scoped, tag = 'output window, operand 0, single buffered']
    %8 = vsyncpa [#allocation3], 0
    %9 = vsyncpa [#allocation6], 0
    %10 = vsyncpa [#allocation4], 0
    // Predicated region
    $region2: #{tpu_custom_call.1} parent=1 // pred_check
      _
    $region3: #{tpu_custom_call.1} parent=1 // pred_check_branch
      %12 = sbr.rel (0) target = $region5
    $region4: #{tpu_custom_call.1} parent=1 // pred_region
      %s14 = ssub.s32 128, 128
      %15 = vsyncadd [#allocation3], %s14
      %s16 = sshll.u32 [#allocation2], 4
      %s17 = int_to_ptr.vmem [resolvable:$true] %s16
      %22 = dma.hbm_to_vmem [thread:$0]  %s0, 128, %s17, [#allocation3], 64, 64, 4
    $region5: #{tpu_custom_call.1} parent=1 // pred_fallthru
      _
    // Predicated region
    $region6: #{tpu_custom_call.1} parent=1 // pred_check
      _
    $region7: #{tpu_custom_call.1} parent=1 // pred_check_branch
      %24 = sbr.rel (0) target = $region9
    $region8: #{tpu_custom_call.1} parent=1 // pred_region
      %s26 = ssub.s32 256, 256
      %27 = vsyncadd [#allocation6], %s26
      %s28 = sshll.u32 [#allocation5], 4
      %s29 = int_to_ptr.vmem [resolvable:$true] %s28
      %34 = dma.hbm_to_vmem [thread:$0]  %s1, 256, %s29, [#allocation6], 64, 64, 4
    $region9: #{tpu_custom_call.1} parent=1 // pred_fallthru
      _
    // Predicated region
    $region10: #{tpu_custom_call.1} parent=1 // pred_check
      _
    $region11: #{tpu_custom_call.1} parent=1 // pred_check_branch
      %36 = sbr.rel (0) target = $region13
    $region12: #{tpu_custom_call.1} parent=1 // pred_region
      _
    $region13: #{tpu_custom_call.1} parent=1 // pred_fallthru
      _
    // Predicated region
    $region14: #{tpu_custom_call.1} parent=1 // pred_check
      _
    $region15: #{tpu_custom_call.1} parent=1 // pred_check_branch
      %38 = sbr.rel (0) target = $region17
    $region16: #{tpu_custom_call.1} parent=1 // pred_region
      %39 = dma.done [#allocation3], 128
    $region17: #{tpu_custom_call.1} parent=1 // pred_fallthru
      _
    // Predicated region
    $region18: #{tpu_custom_call.1} parent=1 // pred_check
      _
    $region19: #{tpu_custom_call.1} parent=1 // pred_check_branch
      %41 = sbr.rel (0) target = $region21
    $region20: #{tpu_custom_call.1} parent=1 // pred_region
      %42 = dma.done [#allocation6], 256
    $region21: #{tpu_custom_call.1} parent=1 // pred_fallthru
      _
    %v44 = vld [vmem:[#allocation2] sm:$0xf]
    %v45 = vld [vmem:[#allocation2 + $0x4] sm:$0xf]
    %v46 = vld [vmem:[#allocation5] sm:$0xf]
    %v47 = vld [vmem:[#allocation5 + $0x4] sm:$0xf]
    %v48 = vld [vmem:[#allocation5 + $0x8] sm:$0xf]
    %v49 = vld [vmem:[#allocation5 + $0xc] sm:$0xf]
    %v50 = vld [vmem:[%s2] sm:$0x1]
    %v52 = vlaneseq
    %v53 = vshrl.u32 %v52, 7
    %v54 = vsub.s32 0, %v53
    %v55 = vrot.slane %v50, %v54
    %v59 = vunpack.c.l.b16 %v44
    %v60 = vunpack.c.l.b16 %v45
    %v61 = vpack.c.b16 %v60, %v59
    %v66 = vunpack.c.l.b16 %v46
    %v67 = vunpack.c.l.b16 %v47
    %v68 = vunpack.c.l.b16 %v48
    %v69 = vunpack.c.l.b16 %v49
    %v70 = vpack.c.b16 %v67, %v66
    %v71 = vpack.c.b16 %v69, %v68
    %vm74 = vcmask 261120
    %v76 = vsel %vm74, %v61, 0
    %78 = vmatprep.subr.bf16.mxu0 0
    %79 = vmatpush1.bf16.msra.mxu0 0
    %80 = vmatprep.subr.bf16.mxu0 0
    %81 = vmatpush1.bf16.msra.mxu0 0
    %82 = vmatprep.subr.bf16.mxu0 0
    %83 = vmatpush1.bf16.msra.mxu0 0
    %84 = vmatprep.subr.bf16.mxu0 0
    %85 = vmatpush1.bf16.msra.mxu0 0
    %86 = vmatprep.subr.bf16.mxu0 0
    %87 = vmatpush1.bf16.msra.mxu0 0
    %88 = vmatprep.subr.bf16.mxu0 0
    %89 = vmatpush1.bf16.msra.mxu0 0
    %90 = vmatprep.subr.bf16.mxu0 0
    %91 = vmatpush1.bf16.msra.mxu0 %v71
    %92 = vmatprep.subr.bf16.mxu0 0
    %93 = vmatpush1.bf16.msra.mxu0 %v70
    %94 = vmatprep.subr.bf16.mxu0 0
    %95 = vmatpush2.bf16.msra.mxu0 0
    %96 = vmatprep.subr.bf16.mxu0 0
    %97 = vmatpush2.bf16.msra.mxu0 0
    %98 = vmatprep.subr.bf16.mxu0 0
    %99 = vmatpush2.bf16.msra.mxu0 0
    %100 = vmatprep.subr.bf16.mxu0 0
    %101 = vmatpush2.bf16.msra.mxu0 0
    %102 = vmatprep.subr.bf16.mxu0 0
    %103 = vmatpush2.bf16.msra.mxu0 0
    %104 = vmatprep.subr.bf16.mxu0 0
    %105 = vmatpush2.bf16.msra.mxu0 0
    %106 = vmatprep.subr.bf16.mxu0 0
    %107 = vmatpush2.bf16.msra.mxu0 0
    %108 = vmatprep.subr.bf16.mxu0 0
    %109 = vmatpush2.bf16.msra.mxu0 0
    %110 = vmatprep.mubr.bf16.mxu0 0
    %111 = vmatmul.mubr.bf16.gmra.mxu0 %v76
    %v112 = vpop.f32.mrf.mxu0
    %v113 = vadd.f32 %v55, %v112
    %v114 = vpop.f32.mrf.mxu0
    %v115 = vpop.f32.mrf.mxu0
    %v116 = vadd.f32 %v55, %v115
    %v117 = vpop.f32.mrf.mxu0
    %118 = vdwg.mxu0
    %v119 = vmax.f32 %v113, 0.0
    %v120 = vmax.f32 %v116, 0.0
    %vm121 = vcmask 523264
    %122 = vst.msk [vmem:[#allocation7] sm:$0xff] %vm121, %v119
    %123 = vst.msk [vmem:[#allocation7 + $0x8] sm:$0xff] %vm121, %v120
    // Predicated region
    $region22: #{tpu_custom_call.1} parent=1 // pred_check
      _
    $region23: #{tpu_custom_call.1} parent=1 // pred_check_branch
      %125 = sbr.rel (0) target = $region25
    $region24: #{tpu_custom_call.1} parent=1 // pred_region
      %s127 = ssub.s32 256, 256
      %128 = vsyncadd [#allocation4], %s127
      %s129 = sshll.u32 [#allocation7], 4
      %s130 = int_to_ptr.vmem [resolvable:$true] %s129
      %135 = dma.vmem_to_hbm [thread:$0]  %s130, 256, %s3, [#allocation4], 128, 128, 8
    $region25: #{tpu_custom_call.1} parent=1 // pred_fallthru
      _
    // Predicated region
    $region26: #{tpu_custom_call.1} parent=1 // pred_check
      _
    $region27: #{tpu_custom_call.1} parent=1 // pred_check_branch
      %137 = sbr.rel (0) target = $region29
    $region28: #{tpu_custom_call.1} parent=1 // pred_region
      %138 = dma.done [#allocation4], 256
    $region29: #{tpu_custom_call.1} parent=1 // pred_fallthru
      _
    %139 = vsyncpa [#allocation3], 1
    %140 = vsyncpa [#allocation6], 1
    %141 = vsyncpa [#allocation4], 1

</llo_original>
